<compile_context>
chip_gen: v5e
topology: v5e:2x2
jax: 0.10.0
libtpu: 0.0.40
codegen_flags: <defaults>
</compile_context>

<pallas_src>
import functools

import jax
import jax.numpy as jnp
from jax.experimental import pallas as pl
from jax.experimental.pallas import tpu as pltpu


# ---------------------------------------------------------------------------
# Fused kernel: linear_in+relu -> gc1 -> bn1+relu -> gc2 -> bn1
# ---------------------------------------------------------------------------
def _gcn_fused_kernel(x_ref, adj_ref, wi_ref, wg_ref, vec_ref, o_ref, *, eps):
    def batchnorm(v, gamma, beta):
        # per-feature normalization over the node (batch) axis, batch stats
        mean = jnp.mean(v, axis=0, keepdims=True)
        var = jnp.mean(jnp.square(v - mean), axis=0, keepdims=True)
        return (v - mean) * jax.lax.rsqrt(var + eps) * gamma + beta

    adj = adj_ref[...]                      # [N, N] f32, reused by both layers

    # Packed per-feature vectors: one tiny DMA instead of five.
    bi = vec_ref[0:1, :]                    # [1, nhid]
    b1 = vec_ref[1:2, :]
    b2 = vec_ref[2:3, :]
    gamma = vec_ref[3:4, :]
    beta = vec_ref[4:5, :]

    # linear_in + relu   (dropout in eval mode == identity)
    h = jnp.dot(x_ref[...], wi_ref[...], preferred_element_type=jnp.float32)
    h = jnp.maximum(h + bi, 0.0)

    # gc1: adj @ (h @ W1 + b1)
    s1 = jnp.dot(h, wg_ref[0], preferred_element_type=jnp.float32) + b1
    h1 = jnp.dot(adj, s1, preferred_element_type=jnp.float32)

    # batch1 + relu   (dropout == identity)
    h1 = jnp.maximum(batchnorm(h1, gamma, beta), 0.0)

    # gc2: adj @ (h1 @ W2 + b2)
    s2 = jnp.dot(h1, wg_ref[1], preferred_element_type=jnp.float32) + b2
    h2 = jnp.dot(adj, s2, preferred_element_type=jnp.float32)

    # batch1 again (the reference reuses batch1 for the second norm)
    o_ref[...] = batchnorm(h2, gamma, beta)


_VMEM = pl.BlockSpec(memory_space=pltpu.MemorySpace.VMEM)


def _gcn_fused(x, adj, wi, wg, vec, *, eps=1e-5):
    n = x.shape[0]
    nhid = wi.shape[1]
    return pl.pallas_call(
        functools.partial(_gcn_fused_kernel, eps=eps),
        out_shape=jax.ShapeDtypeStruct((n, nhid), jnp.float32),
        in_specs=[_VMEM] * 5,
        out_specs=_VMEM,
    )(x, adj, wi, wg, vec)


# ---------------------------------------------------------------------------
# GCN module (parameter container + one-time prep + forward)
# ---------------------------------------------------------------------------
def init_gcn_params(key, nfeat, nhid):
    ks = jax.random.split(key, 4)
    scale_in = 1.0 / jnp.sqrt(nfeat)
    scale_h = 1.0 / jnp.sqrt(nhid)
    return {
        "lin_in_w": jax.random.uniform(ks[0], (nfeat, nhid), jnp.float32,
                                       -scale_in, scale_in),
        "lin_in_b": jax.random.uniform(ks[1], (nhid,), jnp.float32,
                                       -scale_in, scale_in),
        "gc1_w": jax.random.uniform(ks[2], (nhid, nhid), jnp.float32,
                                    -scale_h, scale_h),
        "gc1_b": jnp.zeros((nhid,), jnp.float32),
        "gc2_w": jax.random.uniform(ks[3], (nhid, nhid), jnp.float32,
                                    -scale_h, scale_h),
        "gc2_b": jnp.zeros((nhid,), jnp.float32),
        "bn1_gamma": jnp.ones((nhid,), jnp.float32),
        "bn1_beta": jnp.zeros((nhid,), jnp.float32),
    }


def prepare_params(params):
    """One-time packing (hoisted out of the forward path, per perf review):
    stack the two GraphConv weights and the five per-feature vectors so the
    kernel gets 5 inputs / 5 DMAs instead of 10."""
    wg = jnp.stack([params["gc1_w"], params["gc2_w"]]).astype(jnp.float32)
    vec = jnp.stack([params["lin_in_b"], params["gc1_b"], params["gc2_b"],
                     params["bn1_gamma"], params["bn1_beta"]]).astype(jnp.float32)
    return {
        "lin_in_w": params["lin_in_w"].astype(jnp.float32),   # [nfeat, nhid]
        "gc_w": wg,                                           # [2, nhid, nhid]
        "vecs": vec,                                          # [5, nhid]
    }


@jax.jit
def gcn_forward(prepared, x, adj, features):
    # x: [N, nfeat], adj: [N, N], features: unused (see TODO above)
    del features
    x = x.astype(jnp.float32)
    adj = adj.astype(jnp.float32)   # no-op if caller already pre-converted
    return _gcn_fused(x, adj, prepared["lin_in_w"], prepared["gc_w"],
                      prepared["vecs"])


# ---------------------------------------------------------------------------
# Pure-JAX reference (for a sanity check in __main__)
# ---------------------------------------------------------------------------
def _gcn_reference(params, x, adj, eps=1e-5):
    def bn(v, g, b):
        m = jnp.mean(v, axis=0, keepdims=True)
        var = jnp.mean(jnp.square(v - m), axis=0, keepdims=True)
        return (v - m) * jax.lax.rsqrt(var + eps) * g + b

    adj = adj.astype(jnp.float32)
    h = jnp.maximum(x @ params["lin_in_w"] + params["lin_in_b"], 0.0)
    h1 = adj @ (h @ params["gc1_w"] + params["gc1_b"])
    h1 = jnp.maximum(bn(h1, params["bn1_gamma"], params["bn1_beta"]), 0.0)
    h2 = adj @ (h1 @ params["gc2_w"] + params["gc2_b"])
    return bn(h2, params["bn1_gamma"], params["bn1_beta"])


# ---------------------------------------------------------------------------
if __name__ == "__main__":
    N_NODES = 16
    NFEAT = 8
    NHID = 32

    key = jax.random.PRNGKey(0)
    k_param, k_x, k_adj, k_feat = jax.random.split(key, 4)

    params = init_gcn_params(k_param, NFEAT, NHID)
    prepared = prepare_params(params)      # one-time packing, outside forward

    x = jax.random.normal(k_x, (N_NODES, NFEAT), jnp.float32)
    # symmetric 0/1 adjacency with self-loops (torch passes adj.long())
    a = (jax.random.uniform(k_adj, (N_NODES, N_NODES)) > 0.7).astype(jnp.int32)
    adj = jnp.clip(a + a.T + jnp.eye(N_NODES, dtype=jnp.int32), 0, 1)
    adj = adj.astype(jnp.float32)          # pre-convert once, outside forward
    features = jax.random.normal(k_feat, (N_NODES, N_NODES), jnp.float32)

    out = gcn_forward(prepared, x, adj, features)
    out = jax.block_until_ready(out)

    assert out.shape == (N_NODES, NHID)
    assert jnp.all(jnp.isfinite(out))

    ref = _gcn_reference(params, x, adj)
    assert jnp.allclose(out, ref, atol=2e-2, rtol=2e-2)

    print("KERNEL_OK")
</pallas_src>

<mosaic_0001>
module attributes {stable_mosaic.version = 11 : i64} {
  func.func @_gcn_fused_kernel(%arg0: memref<16x8xf32, #tpu.memory_space<vmem>>, %arg1: memref<16x16xf32, #tpu.memory_space<vmem>>, %arg2: memref<8x32xf32, #tpu.memory_space<vmem>>, %arg3: memref<2x32x32xf32, #tpu.memory_space<vmem>>, %arg4: memref<5x32xf32, #tpu.memory_space<vmem>>, %arg5: memref<16x32xf32, #tpu.memory_space<vmem>>) attributes {dimension_semantics = [], scalar_prefetch = 0 : i64, scratch_operands = 0 : i64, tpu.core_type = #tpu.core_type<tc>} {
    %c0 = arith.constant 0 : index
    %c0_0 = arith.constant 0 : index
    %0 = vector.load %arg1[%c0, %c0_0] : memref<16x16xf32, #tpu.memory_space<vmem>>, vector<16x16xf32>
    %c0_1 = arith.constant 0 : index
    %c0_2 = arith.constant 0 : index
    %1 = vector.load %arg4[%c0_1, %c0_2] : memref<5x32xf32, #tpu.memory_space<vmem>>, vector<1x32xf32>
    %c1 = arith.constant 1 : index
    %c0_3 = arith.constant 0 : index
    %2 = vector.load %arg4[%c1, %c0_3] : memref<5x32xf32, #tpu.memory_space<vmem>>, vector<1x32xf32>
    %c2 = arith.constant 2 : index
    %c0_4 = arith.constant 0 : index
    %3 = vector.load %arg4[%c2, %c0_4] : memref<5x32xf32, #tpu.memory_space<vmem>>, vector<1x32xf32>
    %c3 = arith.constant 3 : index
    %c0_5 = arith.constant 0 : index
    %4 = vector.load %arg4[%c3, %c0_5] : memref<5x32xf32, #tpu.memory_space<vmem>>, vector<1x32xf32>
    %c4 = arith.constant 4 : index
    %c0_6 = arith.constant 0 : index
    %5 = vector.load %arg4[%c4, %c0_6] : memref<5x32xf32, #tpu.memory_space<vmem>>, vector<1x32xf32>
    %c0_7 = arith.constant 0 : index
    %c0_8 = arith.constant 0 : index
    %6 = vector.load %arg0[%c0_7, %c0_8] : memref<16x8xf32, #tpu.memory_space<vmem>>, vector<16x8xf32>
    %c0_9 = arith.constant 0 : index
    %c0_10 = arith.constant 0 : index
    %7 = vector.load %arg2[%c0_9, %c0_10] : memref<8x32xf32, #tpu.memory_space<vmem>>, vector<8x32xf32>
    %cst = arith.constant dense<0.000000e+00> : vector<16x32xf32>
    %8 = tpu.matmul %6, %7, %cst {dimension_numbers = #tpu.dot_dimension_numbers<[1], [0], [0], [1], [0, 0, 1, 1], [], []>} : vector<16x8xf32>, vector<8x32xf32>, vector<16x32xf32> -> vector<16x32xf32>
    %9 = vector.broadcast %1 : vector<1x32xf32> to vector<16x32xf32>
    %10 = arith.addf %8, %9 : vector<16x32xf32>
    %cst_11 = arith.constant 0.000000e+00 : f32
    %11 = vector.broadcast %cst_11 : f32 to vector<16x32xf32>
    %12 = arith.maximumf %10, %11 : vector<16x32xf32>
    %c0_12 = arith.constant 0 : index
    %c0_13 = arith.constant 0 : index
    %c0_14 = arith.constant 0 : index
    %13 = vector.load %arg3[%c0_12, %c0_13, %c0_14] : memref<2x32x32xf32, #tpu.memory_space<vmem>>, vector<1x32x32xf32>
    %14 = vector.shape_cast %13 : vector<1x32x32xf32> to vector<32x32xf32>
    %cst_15 = arith.constant dense<0.000000e+00> : vector<16x32xf32>
    %15 = tpu.matmul %12, %14, %cst_15 {dimension_numbers = #tpu.dot_dimension_numbers<[1], [0], [0], [1], [0, 0, 1, 1], [], []>} : vector<16x32xf32>, vector<32x32xf32>, vector<16x32xf32> -> vector<16x32xf32>
    %16 = vector.broadcast %2 : vector<1x32xf32> to vector<16x32xf32>
    %17 = arith.addf %15, %16 : vector<16x32xf32>
    %cst_16 = arith.constant dense<0.000000e+00> : vector<16x32xf32>
    %18 = tpu.matmul %0, %17, %cst_16 {dimension_numbers = #tpu.dot_dimension_numbers<[1], [0], [0], [1], [0, 0, 1, 1], [], []>} : vector<16x16xf32>, vector<16x32xf32>, vector<16x32xf32> -> vector<16x32xf32>
    %cst_17 = arith.constant dense<0.000000e+00> : vector<32xf32>
    %19 = vector.multi_reduction <add>, %18, %cst_17 [0] : vector<16x32xf32> to vector<32xf32>
    %20 = vector.shape_cast %19 : vector<32xf32> to vector<1x32xf32>
    %cst_18 = arith.constant 1.600000e+01 : f32
    %21 = vector.broadcast %cst_18 : f32 to vector<1x32xf32>
    %22 = arith.divf %20, %21 : vector<1x32xf32>
    %23 = vector.broadcast %22 : vector<1x32xf32> to vector<16x32xf32>
    %24 = arith.subf %18, %23 : vector<16x32xf32>
    %25 = arith.mulf %24, %24 : vector<16x32xf32>
    %cst_19 = arith.constant dense<0.000000e+00> : vector<32xf32>
    %26 = vector.multi_reduction <add>, %25, %cst_19 [0] : vector<16x32xf32> to vector<32xf32>
    %27 = vector.shape_cast %26 : vector<32xf32> to vector<1x32xf32>
    %cst_20 = arith.constant 1.600000e+01 : f32
    %28 = vector.broadcast %cst_20 : f32 to vector<1x32xf32>
    %29 = arith.divf %27, %28 : vector<1x32xf32>
    %30 = vector.broadcast %22 : vector<1x32xf32> to vector<16x32xf32>
    %31 = arith.subf %18, %30 : vector<16x32xf32>
    %cst_21 = arith.constant 9.99999974E-6 : f32
    %32 = vector.broadcast %cst_21 : f32 to vector<1x32xf32>
    %33 = arith.addf %29, %32 : vector<1x32xf32>
    %34 = math.rsqrt %33 : vector<1x32xf32>
    %35 = vector.broadcast %34 : vector<1x32xf32> to vector<16x32xf32>
    %36 = arith.mulf %31, %35 : vector<16x32xf32>
    %37 = vector.broadcast %4 : vector<1x32xf32> to vector<16x32xf32>
    %38 = arith.mulf %36, %37 : vector<16x32xf32>
    %39 = vector.broadcast %5 : vector<1x32xf32> to vector<16x32xf32>
    %40 = arith.addf %38, %39 : vector<16x32xf32>
    %cst_22 = arith.constant 0.000000e+00 : f32
    %41 = vector.broadcast %cst_22 : f32 to vector<16x32xf32>
    %42 = arith.maximumf %40, %41 : vector<16x32xf32>
    %c1_23 = arith.constant 1 : index
    %c0_24 = arith.constant 0 : index
    %c0_25 = arith.constant 0 : index
    %43 = vector.load %arg3[%c1_23, %c0_24, %c0_25] : memref<2x32x32xf32, #tpu.memory_space<vmem>>, vector<1x32x32xf32>
    %44 = vector.shape_cast %43 : vector<1x32x32xf32> to vector<32x32xf32>
    %cst_26 = arith.constant dense<0.000000e+00> : vector<16x32xf32>
    %45 = tpu.matmul %42, %44, %cst_26 {dimension_numbers = #tpu.dot_dimension_numbers<[1], [0], [0], [1], [0, 0, 1, 1], [], []>} : vector<16x32xf32>, vector<32x32xf32>, vector<16x32xf32> -> vector<16x32xf32>
    %46 = vector.broadcast %3 : vector<1x32xf32> to vector<16x32xf32>
    %47 = arith.addf %45, %46 : vector<16x32xf32>
    %cst_27 = arith.constant dense<0.000000e+00> : vector<16x32xf32>
    %48 = tpu.matmul %0, %47, %cst_27 {dimension_numbers = #tpu.dot_dimension_numbers<[1], [0], [0], [1], [0, 0, 1, 1], [], []>} : vector<16x16xf32>, vector<16x32xf32>, vector<16x32xf32> -> vector<16x32xf32>
    %cst_28 = arith.constant dense<0.000000e+00> : vector<32xf32>
    %49 = vector.multi_reduction <add>, %48, %cst_28 [0] : vector<16x32xf32> to vector<32xf32>
    %50 = vector.shape_cast %49 : vector<32xf32> to vector<1x32xf32>
    %cst_29 = arith.constant 1.600000e+01 : f32
    %51 = vector.broadcast %cst_29 : f32 to vector<1x32xf32>
    %52 = arith.divf %50, %51 : vector<1x32xf32>
    %53 = vector.broadcast %52 : vector<1x32xf32> to vector<16x32xf32>
    %54 = arith.subf %48, %53 : vector<16x32xf32>
    %55 = arith.mulf %54, %54 : vector<16x32xf32>
    %cst_30 = arith.constant dense<0.000000e+00> : vector<32xf32>
    %56 = vector.multi_reduction <add>, %55, %cst_30 [0] : vector<16x32xf32> to vector<32xf32>
    %57 = vector.shape_cast %56 : vector<32xf32> to vector<1x32xf32>
    %cst_31 = arith.constant 1.600000e+01 : f32
    %58 = vector.broadcast %cst_31 : f32 to vector<1x32xf32>
    %59 = arith.divf %57, %58 : vector<1x32xf32>
    %60 = vector.broadcast %52 : vector<1x32xf32> to vector<16x32xf32>
    %61 = arith.subf %48, %60 : vector<16x32xf32>
    %cst_32 = arith.constant 9.99999974E-6 : f32
    %62 = vector.broadcast %cst_32 : f32 to vector<1x32xf32>
    %63 = arith.addf %59, %62 : vector<1x32xf32>
    %64 = math.rsqrt %63 : vector<1x32xf32>
    %65 = vector.broadcast %64 : vector<1x32xf32> to vector<16x32xf32>
    %66 = arith.mulf %61, %65 : vector<16x32xf32>
    %67 = vector.broadcast %4 : vector<1x32xf32> to vector<16x32xf32>
    %68 = arith.mulf %66, %67 : vector<16x32xf32>
    %69 = vector.broadcast %5 : vector<1x32xf32> to vector<16x32xf32>
    %70 = arith.addf %68, %69 : vector<16x32xf32>
    %c0_33 = arith.constant 0 : index
    %c0_34 = arith.constant 0 : index
    %71 = vector.load %arg5[%c0_33, %c0_34] : memref<16x32xf32, #tpu.memory_space<vmem>>, vector<16x32xf32>
    tpu.vector_store %arg5[%c0_33, %c0_34], %70 {strides = array<i32>} : memref<16x32xf32, #tpu.memory_space<vmem>>, vector<16x32xf32>,
    return
  }
}

</mosaic_0001>

<llo_original>
// kernel: gcn_forward.1
$region0: #{gcn_forward.1}
  #allocation0 [shape = 'u32[]', space=smem, size = 0x4, offset = 0x4, fixed_abs, tag = 'smem constant byte address 0x4 - core index']
  #allocation1 [shape = 'u32[72,128]{1,0:T(1,128)}', space=vmem, size = 0x9000, scoped, tag = 'internal scratch']
  %s0 = inlined_call_operand.vmem [shape: f32[16,8], index: 0, kind: input, shape index: {}]
  %s1 = inlined_call_operand.vmem [shape: f32[16,16], index: 1, kind: input, shape index: {}]
  %s2 = inlined_call_operand.vmem [shape: f32[8,32], index: 2, kind: input, shape index: {}]
  %s3 = inlined_call_operand.hbm [shape: f32[2,32,32], index: 3, kind: input, shape index: {}]
  %s4 = inlined_call_operand.hbm [shape: f32[5,32], index: 4, kind: input, shape index: {}]
  %s5 = inlined_call_operand.hbm [shape: f32[16,32], index: 5, kind: output, shape index: {}]
  %s6 = sld [smem:[#allocation0]]
  $region38: #{gcn_forward.1} parent=0
    _
  %s8 = ssub.s32 1, %s6
  %s9 = scalar_select 0, %s8, %s6
  $region1: #{gcn_forward.1} parent=0
    #allocation2 [shape = 'u8[32768]{0}', space=vmem, size = 0x8000, scoped, tag = 'input window, operand 3, single buffered']
    #allocation3 [shape = 's32[1]{0}', space=sflag, size = 0x4, scoped, tag = 'scoped memory for gcn_forward.1']
    #allocation4 [shape = 's32[1]{0}', space=sflag, size = 0x4, scoped, tag = 'scoped memory for gcn_forward.1']
    #allocation5 [shape = 'u8[4096]{0}', space=vmem, size = 0x1000, scoped, tag = 'input window, operand 4, single buffered']
    #allocation6 [shape = 's32[1]{0}', space=sflag, size = 0x4, scoped, tag = 'scoped memory for gcn_forward.1']
    #allocation7 [shape = 'u8[8192]{0}', space=vmem, size = 0x2000, scoped, tag = 'output window, operand 0, single buffered']
    %10 = vsyncpa [#allocation3], 0
    %11 = vsyncpa [#allocation6], 0
    %12 = vsyncpa [#allocation4], 0
    // Predicated region
    $region2: #{gcn_forward.1} parent=1 // pred_check
      _
    $region3: #{gcn_forward.1} parent=1 // pred_check_branch
      %14 = sbr.rel (0) target = $region5
    $region4: #{gcn_forward.1} parent=1 // pred_region
      _
    $region5: #{gcn_forward.1} parent=1 // pred_fallthru
      _
    // Predicated region
    $region6: #{gcn_forward.1} parent=1 // pred_check
      _
    $region7: #{gcn_forward.1} parent=1 // pred_check_branch
      %16 = sbr.rel (0) target = $region9
    $region8: #{gcn_forward.1} parent=1 // pred_region
      _
    $region9: #{gcn_forward.1} parent=1 // pred_fallthru
      _
    // Predicated region
    $region10: #{gcn_forward.1} parent=1 // pred_check
      _
    $region11: #{gcn_forward.1} parent=1 // pred_check_branch
      %18 = sbr.rel (0) target = $region13
    $region12: #{gcn_forward.1} parent=1 // pred_region
      _
    $region13: #{gcn_forward.1} parent=1 // pred_fallthru
      _
    // Predicated region
    $region14: #{gcn_forward.1} parent=1 // pred_check
      _
    $region15: #{gcn_forward.1} parent=1 // pred_check_branch
      %20 = sbr.rel (0) target = $region17
    $region16: #{gcn_forward.1} parent=1 // pred_region
      %22 = vsyncadd [#allocation3], 0
      %s23 = sshll.u32 %s3, 4
      %s24 = int_to_ptr.hbm [resolvable:$true] %s23
      %s25 = sshll.u32 [#allocation2], 4
      %s26 = int_to_ptr.vmem [resolvable:$true] %s25
      %31 = dma.hbm_to_vmem [thread:$0]  %s24, 1024, %s26, [#allocation3], 128, 128, 8
    $region17: #{gcn_forward.1} parent=1 // pred_fallthru
      _
    // Predicated region
    $region18: #{gcn_forward.1} parent=1 // pred_check
      _
    $region19: #{gcn_forward.1} parent=1 // pred_check_branch
      %33 = sbr.rel (0) target = $region21
    $region20: #{gcn_forward.1} parent=1 // pred_region
      %35 = vsyncadd [#allocation6], 0
      %s37 = sshll.u32 %s4, 4
      %s38 = int_to_ptr.hbm [resolvable:$true] %s37
      %s39 = sshll.u32 [#allocation5], 4
      %s40 = int_to_ptr.vmem [resolvable:$true] %s39
      %42 = dma.hbm_to_vmem [thread:$0]  %s38, 128, %s40, [#allocation6]
    $region21: #{gcn_forward.1} parent=1 // pred_fallthru
      _
    // Predicated region
    $region22: #{gcn_forward.1} parent=1 // pred_check
      _
    $region23: #{gcn_forward.1} parent=1 // pred_check_branch
      %44 = sbr.rel (0) target = $region25
    $region24: #{gcn_forward.1} parent=1 // pred_region
      %46 = dma.done [#allocation3], 1024
    $region25: #{gcn_forward.1} parent=1 // pred_fallthru
      _
    // Predicated region
    $region26: #{gcn_forward.1} parent=1 // pred_check
      _
    $region27: #{gcn_forward.1} parent=1 // pred_check_branch
      %48 = sbr.rel (0) target = $region29
    $region28: #{gcn_forward.1} parent=1 // pred_region
      %50 = dma.done [#allocation6], 128
    $region29: #{gcn_forward.1} parent=1 // pred_fallthru
      _
    %v51 = vld [vmem:[%s1] sm:$0xff]
    %v52 = vld [vmem:[%s1 + $0x8] sm:$0xff]
    %v53 = vld [vmem:[#allocation5] sm:$0x1]
    %v54 = vld [vmem:[#allocation5 + $0x1] sm:$0x1]
    %v55 = vld [vmem:[#allocation5 + $0x2] sm:$0x1]
    %v56 = vld [vmem:[#allocation5 + $0x3] sm:$0x1]
    %v57 = vld [vmem:[#allocation5 + $0x4] sm:$0x1]
    %v58 = vld [vmem:[%s0] sm:$0xff]
    %v59 = vld [vmem:[%s0 + $0x8] sm:$0xff]
    %v60 = vld [vmem:[%s2] sm:$0xff]
    %v61 = vperm.slane %v53, 0
    %vm62 = vcmask 64512
    %v64 = vsel %vm62, %v58, 0
    %v67 = vsel %vm62, %v59, 0
    %69 = vmatpush.msra.mxu0 0.0
    %70 = vmatpush.msra.mxu0 0.0
    %71 = vmatpush.msra.mxu0 0.0
    %72 = vmatpush.msra.mxu0 0.0
    %73 = vmatpush.msra.mxu0 0.0
    %74 = vmatpush.msra.mxu0 0.0
    %75 = vmatpush.msra.mxu0 0.0
    %76 = vmatpush.msra.mxu0 0.0
    %77 = vmatpush.msra.mxu0 0.0
    %78 = vmatpush.msra.mxu0 0.0
    %79 = vmatpush.msra.mxu0 0.0
    %80 = vmatpush.msra.mxu0 0.0
    %81 = vmatpush.msra.mxu0 0.0
    %82 = vmatpush.msra.mxu0 0.0
    %83 = vmatpush.msra.mxu0 0.0
    %84 = vmatpush.msra.mxu0 %v60
    %85 = vmatmul.f32.gmra.mxu0 %v64
    %v86 = vpop.f32.mrf.mxu0
    %v87 = vadd.f32 %v61, %v86
    %88 = vmatmul.f32.gmra.mxu0 %v67
    %v89 = vpop.f32.mrf.mxu0
    %v90 = vadd.f32 %v61, %v89
    %91 = vdwg.mxu0
    %v92 = vmax.f32 %v87, 0.0
    %v93 = vmax.f32 %v90, 0.0
    %v94 = vld [vmem:[#allocation2] sm:$0xff]
    %v95 = vld [vmem:[#allocation2 + $0x8] sm:$0xff]
    %v96 = vld [vmem:[#allocation2 + $0x10] sm:$0xff]
    %v97 = vld [vmem:[#allocation2 + $0x18] sm:$0xff]
    %v98 = vperm.slane %v54, 0
    %vm99 = vcmask 261120
    %v101 = vsel %vm99, %v92, 0
    %v104 = vsel %vm99, %v93, 0
    %106 = vmatpush.msra.mxu0 0.0
    %107 = vmatpush.msra.mxu0 0.0
    %108 = vmatpush.msra.mxu0 0.0
    %109 = vmatpush.msra.mxu0 0.0
    %110 = vmatpush.msra.mxu0 0.0
    %111 = vmatpush.msra.mxu0 0.0
    %112 = vmatpush.msra.mxu0 0.0
    %113 = vmatpush.msra.mxu0 0.0
    %114 = vmatpush.msra.mxu0 0.0
    %115 = vmatpush.msra.mxu0 0.0
    %116 = vmatpush.msra.mxu0 0.0
    %117 = vmatpush.msra.mxu0 0.0
    %118 = vmatpush.msra.mxu0 %v97
    %119 = vmatpush.msra.mxu0 %v96
    %120 = vmatpush.msra.mxu0 %v95
    %121 = vmatpush.msra.mxu0 %v94
    %122 = vmatmul.f32.gmra.mxu0 %v101
    %v123 = vpop.f32.mrf.mxu0
    %v124 = vadd.f32 %v98, %v123
    %125 = vmatmul.f32.gmra.mxu0 %v104
    %v126 = vpop.f32.mrf.mxu0
    %v127 = vadd.f32 %v98, %v126
    %128 = vdwg.mxu0
    %vm129 = vcmask 130048
    %v131 = vsel %vm129, %v51, 0
    %v134 = vsel %vm129, %v52, 0
    %136 = vmatpush.msra.mxu0 0.0
    %137 = vmatpush.msra.mxu0 0.0
    %138 = vmatpush.msra.mxu0 0.0
    %139 = vmatpush.msra.mxu0 0.0
    %140 = vmatpush.msra.mxu0 0.0
    %141 = vmatpush.msra.mxu0 0.0
    %142 = vmatpush.msra.mxu0 0.0
    %143 = vmatpush.msra.mxu0 0.0
    %144 = vmatpush.msra.mxu0 0.0
    %145 = vmatpush.msra.mxu0 0.0
    %146 = vmatpush.msra.mxu0 0.0
    %147 = vmatpush.msra.mxu0 0.0
    %148 = vmatpush.msra.mxu0 0.0
    %149 = vmatpush.msra.mxu0 0.0
    %150 = vmatpush.msra.mxu0 %v127
    %151 = vmatpush.msra.mxu0 %v124
    %152 = vmatmul.f32.gmra.mxu0 %v131
    %v153 = vpop.f32.mrf.mxu0
    %v154 = vadd.f32 0.0, %v153
    %155 = vmatmul.f32.gmra.mxu0 %v134
    %v156 = vpop.f32.mrf.mxu0
    %v157 = vadd.f32 0.0, %v156
    %158 = vdwg.mxu0
    %v159 = vsel %vm99, %v154, 0.0
    %v160 = vsel %vm99, %v157, 0.0
    %v161 = vadd.f32 %v159, %v160
    %v162 = vrot.slane %v161, 4
    %v163 = vadd.f32 %v161, %v162
    %v164 = vrot.slane %v163, 2
    %v165 = vadd.f32 %v163, %v164
    %v166 = vrot.slane %v165, 1
    %v167 = vadd.f32 %v165, %v166
    %v168 = vrcp.pop 16.0
    %v169 = vmul.f32 16.0, %v168
    %v170 = vsub.f32 1.0, %v169
    %v171 = vmul.f32 %v168, %v170
    %v172 = vadd.f32 %v168, %v171
    %vm173 = vweird.f32 %v168
    %v174 = vsel %vm173, %v168, %v172
    %v175 = vmul.f32 %v167, %v174
    %v176 = vsub.f32 %v154, %v175
    %v177 = vsub.f32 %v157, %v175
    %v178 = vmul.f32 %v176, %v176
    %v179 = vmul.f32 %v177, %v177
    %v180 = vsel %vm99, %v178, 0.0
    %v181 = vsel %vm99, %v179, 0.0
    %v182 = vadd.f32 %v180, %v181
    %v183 = vrot.slane %v182, 4
    %v184 = vadd.f32 %v182, %v183
    %v185 = vrot.slane %v184, 2
    %v186 = vadd.f32 %v184, %v185
    %v187 = vrot.slane %v186, 1
    %v188 = vadd.f32 %v186, %v187
    %v189 = vmul.f32 %v188, %v174
    %v190 = vadd.f32 %v189, 1e-05
    %v191 = vrsqrt.pop %v190
    %v192 = vmul.f32 %v191, %v190
    %v193 = vmul.f32 %v192, %v191
    %v194 = vmul.f32 0.5, %v193
    %v195 = vsub.f32 1.5, %v194
    %v196 = vmul.f32 %v191, %v195
    %vm197 = vweird.f32 %v190
    %vm198 = vweird.f32 %v191
    %vm199 = vmor %vm197, %vm198
    %v200 = vsel %vm199, %v191, %v196
    %v201 = vmul.f32 %v176, %v200
    %v202 = vmul.f32 %v177, %v200
    %v203 = vperm.slane %v56, 0
    %v204 = vmul.f32 %v201, %v203
    %v205 = vmul.f32 %v202, %v203
    %v206 = vperm.slane %v57, 0
    %v207 = vadd.f32 %v204, %v206
    %v208 = vadd.f32 %v205, %v206
    %v209 = vmax.f32 %v207, 0.0
    %v210 = vmax.f32 %v208, 0.0
    %s211 = scalar_lea.vmem [#allocation2], 32
    %v212 = vld [vmem:[%s211] sm:$0xff]
    %v213 = vld [vmem:[%s211 + $0x8] sm:$0xff]
    %v214 = vld [vmem:[%s211 + $0x10] sm:$0xff]
    %v215 = vld [vmem:[%s211 + $0x18] sm:$0xff]
    %v216 = vperm.slane %v55, 0
    %v218 = vsel %vm99, %v209, 0
    %v221 = vsel %vm99, %v210, 0
    %223 = vmatpush.msra.mxu0 0.0
    %224 = vmatpush.msra.mxu0 0.0
    %225 = vmatpush.msra.mxu0 0.0
    %226 = vmatpush.msra.mxu0 0.0
    %227 = vmatpush.msra.mxu0 0.0
    %228 = vmatpush.msra.mxu0 0.0
    %229 = vmatpush.msra.mxu0 0.0
    %230 = vmatpush.msra.mxu0 0.0
    %231 = vmatpush.msra.mxu0 0.0
    %232 = vmatpush.msra.mxu0 0.0
    %233 = vmatpush.msra.mxu0 0.0
    %234 = vmatpush.msra.mxu0 0.0
    %235 = vmatpush.msra.mxu0 %v215
    %236 = vmatpush.msra.mxu0 %v214
    %237 = vmatpush.msra.mxu0 %v213
    %238 = vmatpush.msra.mxu0 %v212
    %239 = vmatmul.f32.gmra.mxu0 %v218
    %v240 = vpop.f32.mrf.mxu0
    %v241 = vadd.f32 %v216, %v240
    %242 = vmatmul.f32.gmra.mxu0 %v221
    %v243 = vpop.f32.mrf.mxu0
    %v244 = vadd.f32 %v216, %v243
    %245 = vdwg.mxu0
    %246 = vmatpush.msra.mxu0 0.0
    %247 = vmatpush.msra.mxu0 0.0
    %248 = vmatpush.msra.mxu0 0.0
    %249 = vmatpush.msra.mxu0 0.0
    %250 = vmatpush.msra.mxu0 0.0
    %251 = vmatpush.msra.mxu0 0.0
    %252 = vmatpush.msra.mxu0 0.0
    %253 = vmatpush.msra.mxu0 0.0
    %254 = vmatpush.msra.mxu0 0.0
    %255 = vmatpush.msra.mxu0 0.0
    %256 = vmatpush.msra.mxu0 0.0
    %257 = vmatpush.msra.mxu0 0.0
    %258 = vmatpush.msra.mxu0 0.0
    %259 = vmatpush.msra.mxu0 0.0
    %260 = vmatpush.msra.mxu0 %v244
    %261 = vmatpush.msra.mxu0 %v241
    %262 = vmatmul.f32.gmra.mxu0 %v131
    %v263 = vpop.f32.mrf.mxu0
    %v264 = vadd.f32 0.0, %v263
    %265 = vmatmul.f32.gmra.mxu0 %v134
    %v266 = vpop.f32.mrf.mxu0
    %v267 = vadd.f32 0.0, %v266
    %268 = vdwg.mxu0
    %v269 = vsel %vm99, %v264, 0.0
    %v270 = vsel %vm99, %v267, 0.0
    %v271 = vadd.f32 %v269, %v270
    %v272 = vrot.slane %v271, 4
    %v273 = vadd.f32 %v271, %v272
    %v274 = vrot.slane %v273, 2
    %v275 = vadd.f32 %v273, %v274
    %v276 = vrot.slane %v275, 1
    %v277 = vadd.f32 %v275, %v276
    %v278 = vmul.f32 %v277, %v174
    %v279 = vsub.f32 %v264, %v278
    %v280 = vsub.f32 %v267, %v278
    %v281 = vmul.f32 %v279, %v279
    %v282 = vmul.f32 %v280, %v280
    %v283 = vsel %vm99, %v281, 0.0
    %v284 = vsel %vm99, %v282, 0.0
    %v285 = vadd.f32 %v283, %v284
    %v286 = vrot.slane %v285, 4
    %v287 = vadd.f32 %v285, %v286
    %v288 = vrot.slane %v287, 2
    %v289 = vadd.f32 %v287, %v288
    %v290 = vrot.slane %v289, 1
    %v291 = vadd.f32 %v289, %v290
    %v292 = vmul.f32 %v291, %v174
    %v293 = vadd.f32 %v292, 1e-05
    %v294 = vrsqrt.pop %v293
    %v295 = vmul.f32 %v294, %v293
    %v296 = vmul.f32 %v295, %v294
    %v297 = vmul.f32 0.5, %v296
    %v298 = vsub.f32 1.5, %v297
    %v299 = vmul.f32 %v294, %v298
    %vm300 = vweird.f32 %v293
    %vm301 = vweird.f32 %v294
    %vm302 = vmor %vm300, %vm301
    %v303 = vsel %vm302, %v294, %v299
    %v304 = vmul.f32 %v279, %v303
    %v305 = vmul.f32 %v280, %v303
    %v306 = vmul.f32 %v304, %v203
    %v307 = vmul.f32 %v305, %v203
    %v308 = vadd.f32 %v306, %v206
    %v309 = vadd.f32 %v307, %v206
    %310 = vst.msk [vmem:[#allocation7] sm:$0xff] %vm99, %v308
    %311 = vst.msk [vmem:[#allocation7 + $0x8] sm:$0xff] %vm99, %v309
    // Predicated region
    $region30: #{gcn_forward.1} parent=1 // pred_check
      _
    $region31: #{gcn_forward.1} parent=1 // pred_check_branch
      %313 = sbr.rel (0) target = $region33
    $region32: #{gcn_forward.1} parent=1 // pred_region
      %315 = vsyncadd [#allocation4], 0
      %s316 = sshll.u32 [#allocation7], 4
      %s317 = int_to_ptr.vmem [resolvable:$true] %s316
      %s318 = sshll.u32 %s5, 4
      %s319 = int_to_ptr.hbm [resolvable:$true] %s318
      %324 = dma.vmem_to_hbm [thread:$0]  %s317, 256, %s319, [#allocation4], 128, 128, 8
    $region33: #{gcn_forward.1} parent=1 // pred_fallthru
      _
    // Predicated region
    $region34: #{gcn_forward.1} parent=1 // pred_check
      _
    $region35: #{gcn_forward.1} parent=1 // pred_check_branch
      %326 = sbr.rel (0) target = $region37
    $region36: #{gcn_forward.1} parent=1 // pred_region
      %328 = dma.done [#allocation4], 256
    $region37: #{gcn_forward.1} parent=1 // pred_fallthru
      _
    %329 = vsyncpa [#allocation3], 1
    %330 = vsyncpa [#allocation6], 1
    %331 = vsyncpa [#allocation4], 1

</llo_original>
